<compile_context>
chip_gen: v5e
topology: v5e:2x2
jax: 0.10.0
libtpu: 0.0.40
codegen_flags: <defaults>
</compile_context>

<pallas_src>
import jax
import jax.numpy as jnp
from jax.experimental import pallas as pl
from jax.experimental.pallas import tpu as pltpu


def _round_up(x: int, m: int) -> int:
    return ((x + m - 1) // m) * m


def physical_layer_kernel(rgb_ref, alpha_ref, ft_ref, bt_ref, out_ref):
    # Two tiny-K MXU dots with f32 accumulation + one VPU add per row tile.
    fundamental = jnp.dot(
        rgb_ref[...], ft_ref[...], preferred_element_type=jnp.float32
    )
    black = jnp.dot(
        alpha_ref[...], bt_ref[...], preferred_element_type=jnp.float32
    )
    out_ref[...] = (fundamental + black).astype(out_ref.dtype)


def _device_kind() -> str:
    try:
        return jax.devices()[0].device_kind.lower()
    except Exception:
        return ""


def _vmem_tile_budget_bytes() -> int:
    """Generation-aware VMEM budget for the double-buffered row tiles."""
    kind = _device_kind()
    if "v5" in kind:                      # v5e: 16 MiB default scoped VMEM
        return 12 << 20
    if "v7" in kind or "7x" in kind:      # v7x: 64 MiB physical / 32 MiB scoped per TC
        return 20 << 20
    if "v6" in kind:                      # v6e: 32 MiB default scoped VMEM
        return 24 << 20
    return 12 << 20                       # unknown: stay conservative


def _is_v7x() -> bool:
    kind = _device_kind()
    return "v7" in kind or "7x" in kind


def physical_layer(rgb, alpha, F, B, *, max_tile_n: int = 16384):
    """Pallas implementation of PhysicalLayer.forward.

    rgb:   (N, 3) float32
    alpha: (N, K) float32
    F:     (W, 3) float32   (buffer 'F' in the torch module)
    B:     (W, K) float32   (buffer 'B' in the torch module)
    returns (N, W) float32 == rgb @ F.T + alpha @ B.T
    """
    N, _ = rgb.shape
    K = alpha.shape[1]
    W = F.shape[0]

    # One-time, tiny weight transposes (W*3 and W*K elements; negligible).
    ft = F.T  # (3, W)
    bt = B.T  # (K, W)

    # VMEM bytes per tile row: the three streamed blocks (rgb tile_n x 3,
    # alpha tile_n x K, out tile_n x W) are each lane-padded to a multiple of
    # 128 in VMEM and each is double-buffered by the pipeline.
    lane = 128
    bytes_per_row = 4 * (
        _round_up(3, lane) + _round_up(K, lane) + _round_up(W, lane)
    )
    budget = _vmem_tile_budget_bytes()
    tile_cap = max(8, (budget // (2 * bytes_per_row)) // 8 * 8)
    tile_cap = min(tile_cap, max_tile_n)

    if _is_v7x() and N > 16 * 512:
        # Keep >= ~16 grid steps so ("parallel",) load-balances the 2 TCs.
        tile_cap = min(tile_cap, max(512, _round_up(pl.cdiv(N, 16), 8)))

    if N <= tile_cap:
        tile_n = N          # block == full array dim satisfies the (8,128) rule
    else:
        tile_n = tile_cap   # multiple of 8; ragged last block is clipped by Pallas

    grid = (pl.cdiv(N, tile_n),)

    cost = pl.CostEstimate(
        flops=2 * N * (3 + K) * W,
        transcendentals=0,
        bytes_accessed=4 * (N * (3 + K + W) + 3 * W + K * W),
    )

    return pl.pallas_call(
        physical_layer_kernel,
        out_shape=jax.ShapeDtypeStruct((N, W), rgb.dtype),
        grid_spec=pltpu.PrefetchScalarGridSpec(
            num_scalar_prefetch=0,
            grid=grid,
            in_specs=[
                # Streamed row tiles of the two inputs (no HBM concat/pad).
                pl.BlockSpec((tile_n, 3), lambda i: (i, 0)),
                pl.BlockSpec((tile_n, K), lambda i: (i, 0)),
                # Constant weight slabs: same block every step -> resident in
                # VMEM, DMA'd from HBM once.
                pl.BlockSpec((3, W), lambda i: (0, 0)),
                pl.BlockSpec((K, W), lambda i: (0, 0)),
            ],
            out_specs=pl.BlockSpec((tile_n, W), lambda i: (i, 0)),
        ),
        compiler_params=pltpu.CompilerParams(
            dimension_semantics=("parallel",),
        ),
        cost_estimate=cost,
    )(rgb, alpha, ft, bt)


if __name__ == "__main__":
    key = jax.random.PRNGKey(0)
    k_rgb, k_alpha, k_F, k_B = jax.random.split(key, 4)

    N = 8    # batch of pixels
    K = 4    # black-basis dimension
    W = 32   # number of spectral samples

    rgb = jax.random.uniform(k_rgb, (N, 3), dtype=jnp.float32)
    alpha = jax.random.uniform(k_alpha, (N, K), dtype=jnp.float32)

    # Deterministic synthetic buffers (fundamental_metamer / black_basis).
    F = jax.random.normal(k_F, (W, 3), dtype=jnp.float32)
    B = jax.random.normal(k_B, (W, K), dtype=jnp.float32)

    out = physical_layer(rgb, alpha, F, B)
    out = jax.block_until_ready(out)

    # Reference check against plain JAX semantics of the torch forward.
    ref = rgb @ F.T + alpha @ B.T
    assert out.shape == (N, W)
    assert jnp.allclose(out, ref, atol=1e-5, rtol=1e-5)

    print("KERNEL_OK")
</pallas_src>

<mosaic_0001>
module attributes {stable_mosaic.version = 11 : i64} {
  func.func @physical_layer_kernel(%arg0: i32, %arg1: memref<8x3xf32, #tpu.memory_space<vmem>>, %arg2: memref<8x4xf32, #tpu.memory_space<vmem>>, %arg3: memref<3x32xf32, #tpu.memory_space<vmem>>, %arg4: memref<4x32xf32, #tpu.memory_space<vmem>>, %arg5: memref<8x32xf32, #tpu.memory_space<vmem>>) attributes {dimension_semantics = [#tpu.dimension_semantics<parallel>], iteration_bounds = array<i64: 1>, scalar_prefetch = 0 : i64, scratch_operands = 0 : i64, tpu.core_type = #tpu.core_type<tc>, window_params = [{transform_indices = @transform_0, window_bounds = array<i64: 8, 3>}, {transform_indices = @transform_1, window_bounds = array<i64: 8, 4>}, {pipeline_mode = #tpu.pipeline_mode<synchronous>, transform_indices = @transform_2, window_bounds = array<i64: 3, 32>}, {pipeline_mode = #tpu.pipeline_mode<synchronous>, transform_indices = @transform_3, window_bounds = array<i64: 4, 32>}, {transform_indices = @transform_4, window_bounds = array<i64: 8, 32>}]} {
    %c0 = arith.constant 0 : index
    %c0_0 = arith.constant 0 : index
    %0 = vector.load %arg1[%c0, %c0_0] : memref<8x3xf32, #tpu.memory_space<vmem>>, vector<8x3xf32>
    %c0_1 = arith.constant 0 : index
    %c0_2 = arith.constant 0 : index
    %1 = vector.load %arg3[%c0_1, %c0_2] : memref<3x32xf32, #tpu.memory_space<vmem>>, vector<3x32xf32>
    %cst = arith.constant dense<0.000000e+00> : vector<8x32xf32>
    %2 = tpu.matmul %0, %1, %cst {dimension_numbers = #tpu.dot_dimension_numbers<[1], [0], [0], [1], [0, 0, 1, 1], [], []>} : vector<8x3xf32>, vector<3x32xf32>, vector<8x32xf32> -> vector<8x32xf32>
    %c0_3 = arith.constant 0 : index
    %c0_4 = arith.constant 0 : index
    %3 = vector.load %arg2[%c0_3, %c0_4] : memref<8x4xf32, #tpu.memory_space<vmem>>, vector<8x4xf32>
    %c0_5 = arith.constant 0 : index
    %c0_6 = arith.constant 0 : index
    %4 = vector.load %arg4[%c0_5, %c0_6] : memref<4x32xf32, #tpu.memory_space<vmem>>, vector<4x32xf32>
    %cst_7 = arith.constant dense<0.000000e+00> : vector<8x32xf32>
    %5 = tpu.matmul %3, %4, %cst_7 {dimension_numbers = #tpu.dot_dimension_numbers<[1], [0], [0], [1], [0, 0, 1, 1], [], []>} : vector<8x4xf32>, vector<4x32xf32>, vector<8x32xf32> -> vector<8x32xf32>
    %6 = arith.addf %2, %5 : vector<8x32xf32>
    %c0_8 = arith.constant 0 : index
    %c0_9 = arith.constant 0 : index
    %7 = vector.load %arg5[%c0_8, %c0_9] : memref<8x32xf32, #tpu.memory_space<vmem>>, vector<8x32xf32>
    tpu.vector_store %arg5[%c0_8, %c0_9], %6 {strides = array<i32>} : memref<8x32xf32, #tpu.memory_space<vmem>>, vector<8x32xf32>,
    return
  }
  func.func @transform_0(%arg0: i32) -> (i32, i32) {
    %c0_i32 = arith.constant 0 : i32
    %c0_i32_0 = arith.constant 0 : i32
    return %arg0, %c0_i32 : i32, i32
  }
  func.func @transform_1(%arg0: i32) -> (i32, i32) {
    %c0_i32 = arith.constant 0 : i32
    %c0_i32_0 = arith.constant 0 : i32
    return %arg0, %c0_i32 : i32, i32
  }
  func.func @transform_2(%arg0: i32) -> (i32, i32) {
    %c0_i32 = arith.constant 0 : i32
    %c0_i32_0 = arith.constant 0 : i32
    %c0_i32_1 = arith.constant 0 : i32
    return %c0_i32, %c0_i32_0 : i32, i32
  }
  func.func @transform_3(%arg0: i32) -> (i32, i32) {
    %c0_i32 = arith.constant 0 : i32
    %c0_i32_0 = arith.constant 0 : i32
    %c0_i32_1 = arith.constant 0 : i32
    return %c0_i32, %c0_i32_0 : i32, i32
  }
  func.func @transform_4(%arg0: i32) -> (i32, i32) {
    %c0_i32 = arith.constant 0 : i32
    %c0_i32_0 = arith.constant 0 : i32
    return %arg0, %c0_i32 : i32, i32
  }
}

</mosaic_0001>

<llo_original>
// kernel: tpu_custom_call.1
$region0: #{tpu_custom_call.1}
  #allocation0 [shape = 'u32[]', space=smem, size = 0x4, offset = 0x4, fixed_abs, tag = 'smem constant byte address 0x4 - core index']
  #allocation1 [shape = 'u32[72,128]{1,0:T(1,128)}', space=vmem, size = 0x9000, scoped, tag = 'internal scratch']
  %s0 = inlined_call_operand.vmem [shape: f32[8,3], index: 0, kind: input, shape index: {}]
  %s1 = inlined_call_operand.vmem [shape: f32[8,4], index: 1, kind: input, shape index: {}]
  %s2 = inlined_call_operand.vmem [shape: f32[3,32], index: 2, kind: input, shape index: {}]
  %s3 = inlined_call_operand.vmem [shape: f32[4,32], index: 3, kind: input, shape index: {}]
  %s4 = inlined_call_operand.hbm [shape: f32[8,32], index: 4, kind: output, shape index: {}]
  %s5 = sld [smem:[#allocation0]]
  $region26: #{tpu_custom_call.1} parent=0
    _
  %s7 = ssub.s32 1, %s5
  %s8 = scalar_select 0, %s7, %s5
  $region1: #{tpu_custom_call.1} parent=0
    #allocation2 [shape = 'u8[4096]{0}', space=vmem, size = 0x1000, scoped, tag = 'output window, operand 0, single buffered']
    #allocation3 [shape = 's32[1]{0}', space=sflag, size = 0x4, scoped, tag = 'scoped memory for tpu_custom_call.1']
    %9 = vsyncpa [#allocation3], 0
    // Predicated region
    $region2: #{tpu_custom_call.1} parent=1 // pred_check
      _
    $region3: #{tpu_custom_call.1} parent=1 // pred_check_branch
      %11 = sbr.rel (0) target = $region5
    $region4: #{tpu_custom_call.1} parent=1 // pred_region
      _
    $region5: #{tpu_custom_call.1} parent=1 // pred_fallthru
      _
    // Predicated region
    $region6: #{tpu_custom_call.1} parent=1 // pred_check
      _
    $region7: #{tpu_custom_call.1} parent=1 // pred_check_branch
      %13 = sbr.rel (0) target = $region9
    $region8: #{tpu_custom_call.1} parent=1 // pred_region
      _
    $region9: #{tpu_custom_call.1} parent=1 // pred_fallthru
      _
    // Predicated region
    $region10: #{tpu_custom_call.1} parent=1 // pred_check
      _
    $region11: #{tpu_custom_call.1} parent=1 // pred_check_branch
      %15 = sbr.rel (0) target = $region13
    $region12: #{tpu_custom_call.1} parent=1 // pred_region
      _
    $region13: #{tpu_custom_call.1} parent=1 // pred_fallthru
      _
    // Predicated region
    $region14: #{tpu_custom_call.1} parent=1 // pred_check
      _
    $region15: #{tpu_custom_call.1} parent=1 // pred_check_branch
      %17 = sbr.rel (0) target = $region17
    $region16: #{tpu_custom_call.1} parent=1 // pred_region
      _
    $region17: #{tpu_custom_call.1} parent=1 // pred_fallthru
      _
    %v18 = vld [vmem:[%s0] sm:$0xff]
    %v19 = vld [vmem:[%s2] sm:$0x7]
    %v20 = vld [vmem:[%s1] sm:$0xff]
    %v21 = vld [vmem:[%s3] sm:$0xf]
    %vm22 = vcmask 31744
    %v24 = vsel %vm22, %v20, 0
    %vm26 = vcmask 1043456
    %v28 = vsel %vm26, %v21, 0
    %30 = vmatpush.msra.mxu0 0.0
    %31 = vmatpush.msra.mxu0 0.0
    %32 = vmatpush.msra.mxu0 0.0
    %33 = vmatpush.msra.mxu0 0.0
    %34 = vmatpush.msra.mxu0 0.0
    %35 = vmatpush.msra.mxu0 0.0
    %36 = vmatpush.msra.mxu0 0.0
    %37 = vmatpush.msra.mxu0 0.0
    %38 = vmatpush.msra.mxu0 0.0
    %39 = vmatpush.msra.mxu0 0.0
    %40 = vmatpush.msra.mxu0 0.0
    %41 = vmatpush.msra.mxu0 0.0
    %42 = vmatpush.msra.mxu0 0.0
    %43 = vmatpush.msra.mxu0 0.0
    %44 = vmatpush.msra.mxu0 0.0
    %45 = vmatpush.msra.mxu0 %v28
    %46 = vmatmul.f32.gmra.mxu0 %v24
    %v47 = vpop.f32.mrf.mxu0
    %v48 = vadd.f32 0.0, %v47
    %49 = vdwg.mxu0
    %vm50 = vcmask 23552
    %v52 = vsel %vm50, %v18, 0
    %vm54 = vcmask 1042432
    %v56 = vsel %vm54, %v19, 0
    %58 = vmatpush.msra.mxu0 0.0
    %59 = vmatpush.msra.mxu0 0.0
    %60 = vmatpush.msra.mxu0 0.0
    %61 = vmatpush.msra.mxu0 0.0
    %62 = vmatpush.msra.mxu0 0.0
    %63 = vmatpush.msra.mxu0 0.0
    %64 = vmatpush.msra.mxu0 0.0
    %65 = vmatpush.msra.mxu0 0.0
    %66 = vmatpush.msra.mxu0 0.0
    %67 = vmatpush.msra.mxu0 0.0
    %68 = vmatpush.msra.mxu0 0.0
    %69 = vmatpush.msra.mxu0 0.0
    %70 = vmatpush.msra.mxu0 0.0
    %71 = vmatpush.msra.mxu0 0.0
    %72 = vmatpush.msra.mxu0 0.0
    %73 = vmatpush.msra.mxu0 %v56
    %74 = vmatmul.f32.gmra.mxu0 %v52
    %v75 = vpop.f32.mrf.mxu0
    %v76 = vadd.f32 %v48, %v75
    %77 = vdwg.mxu0
    %vm78 = vcmask 261120
    %79 = vst.msk [vmem:[#allocation2] sm:$0xff] %vm78, %v76
    // Predicated region
    $region18: #{tpu_custom_call.1} parent=1 // pred_check
      _
    $region19: #{tpu_custom_call.1} parent=1 // pred_check_branch
      %81 = sbr.rel (0) target = $region21
    $region20: #{tpu_custom_call.1} parent=1 // pred_region
      %83 = vsyncadd [#allocation3], 0
      %s85 = sshll.u32 [#allocation2], 4
      %s86 = int_to_ptr.vmem [resolvable:$true] %s85
      %s87 = sshll.u32 %s4, 4
      %s88 = int_to_ptr.hbm [resolvable:$true] %s87
      %90 = dma.vmem_to_hbm [thread:$0]  %s86, 128, %s88, [#allocation3]
    $region21: #{tpu_custom_call.1} parent=1 // pred_fallthru
      _
    // Predicated region
    $region22: #{tpu_custom_call.1} parent=1 // pred_check
      _
    $region23: #{tpu_custom_call.1} parent=1 // pred_check_branch
      %92 = sbr.rel (0) target = $region25
    $region24: #{tpu_custom_call.1} parent=1 // pred_region
      %94 = dma.done [#allocation3], 128
    $region25: #{tpu_custom_call.1} parent=1 // pred_fallthru
      _
    %95 = vsyncpa [#allocation3], 1

</llo_original>
